<compile_context>
chip_gen: v6e
topology: v6e:2x2x1
jax: 0.10.0
libtpu: 0.0.40
codegen_flags: <defaults>
</compile_context>

<pallas_src>
import jax
import jax.numpy as jnp
from jax.experimental import pallas as pl
from jax.experimental.pallas import tpu as pltpu


def _make_kernel(nb, C):
    """nb conv branches, C channels per branch."""

    def kernel(x_ref, w_ref, b_ref, sel_ref, invt_ref, fcw_ref, fcb_ref,
               out_ref):
        # x_ref:    (rows, kmax*E) bf16  tap-packed rows (batch*time flattened)
        # w_ref:    (kmax*E, nb*C) bf16  fused conv weight ((k,e)-major rows)
        # b_ref:    (1, nb*C)      f32   fused conv bias
        # sel_ref:  (nb, BB, rows) bf16  per-branch {0,1} pooling selectors
        # invt_ref: (1, nb*C)      f32   per-branch 1/T_K
        # fcw_ref:  (nb*C, OP)     bf16  FC weight, lane-padded
        # fcb_ref:  (1, OP)        f32   FC bias (-1e30 on padded lanes)
        # out_ref:  (BB, OP)       f32   softmax probabilities
        conv = jnp.dot(x_ref[...], w_ref[...],
                       preferred_element_type=jnp.float32)          # (rows, 3C)
        act = jnp.maximum(conv + b_ref[...], 0.0).astype(jnp.bfloat16)
        # Masked sum over time as nb MXU matmuls against the {0,1} selectors,
        # then the exact mean scaling on the tiny pooled tile in f32.
        pooled = jnp.concatenate(
            [jnp.dot(sel_ref[j], act[:, j * C:(j + 1) * C],
                     preferred_element_type=jnp.float32)
             for j in range(nb)], axis=1)                           # (BB, 3C)
        pooled = (pooled * invt_ref[...]).astype(jnp.bfloat16)
        logits = jnp.dot(pooled, fcw_ref[...],
                         preferred_element_type=jnp.float32) + fcb_ref[...]
        m = jnp.max(logits, axis=1, keepdims=True)                  # softmax f32
        ex = jnp.exp(logits - m)
        denom = jnp.sum(ex, axis=1, keepdims=True)
        out_ref[...] = ex * pl.reciprocal(denom, approx=False)

    return kernel


def cnn_classifier_forward(x, conv_params, fc_w, fc_b, *, batch_block=64):
    """x: (B, W, E) f32.  conv_params: list of (K, weight (C,1,K,E), bias (C,)).
    fc_w: (O, n*C) (PyTorch Linear layout), fc_b: (O,)."""
    x = jnp.asarray(x, jnp.float32)
    B, W, E = x.shape
    ks = [int(k) for k, _, _ in conv_params]
    kmax = max(ks)
    assert W >= kmax, "word_num must be >= the largest conv kernel size"
    C = int(conv_params[0][1].shape[0])
    nb = len(conv_params)
    C3 = nb * C
    O = int(fc_b.shape[0])
    OP = max(128, ((O + 127) // 128) * 128)
    kE = kmax * E

    W_row = ((W + 7) // 8) * 8            # per-sample row stride in the slab
    assert W_row >= W                     # padded rows are masked by selectors

    # ---- per-generation VMEM budget -----------------------------------------
    try:
        vmem_cap = int(pltpu.get_tpu_info().vmem_capacity_bytes)
    except Exception:
        vmem_cap = 64 << 20               # conservative (v7x-sized) fallback
    vmem_limit = min(int(vmem_cap * 0.75), 100 << 20)

    def _vmem_bytes(bb):
        rows_ = bb * W_row
        return (2 * rows_ * kE * 2        # double-buffered bf16 x tile
                + rows_ * C3 * 4          # f32 conv matmul result
                + rows_ * C3 * 2          # bf16 activation copy
                + nb * bb * rows_ * 2     # single-buffered selectors
                + kE * C3 * 2 + C3 * OP * 2   # resident weights
                + 2 * bb * OP * 4         # double-buffered output
                + (4 << 20))              # headroom (biases, vregs, spills)

    # ---- batch tiling --------------------------------------------------------
    BB = min(B, batch_block, max(8, (kE // 8) * 8))   # cap pooling FLOP growth
    if B > 8:
        BB = max(8, (BB // 8) * 8)
        while BB > 8 and _vmem_bytes(BB) > vmem_limit:
            BB -= 8
        # Give the second TensorCore work (v7x megacore) when batch allows G>=2.
        half = (((B + 1) // 2) + 7) // 8 * 8
        if half < BB:
            BB = half
    Bp = ((B + BB - 1) // BB) * BB
    G = Bp // BB
    rows = BB * W_row

    # ---- tap-packed input slab: (G, rows, kmax*E) bf16 ----------------------
    xp = jnp.pad(x, ((0, Bp - B), (0, W_row + kmax - 1 - W), (0, 0)))
    x_tap = jnp.concatenate([xp[:, k:k + W_row, :] for k in range(kmax)],
                            axis=-1)                          # (Bp, W_row, kE)
    x_slab = x_tap.reshape(G, rows, kE).astype(jnp.bfloat16)

    # ---- fused conv weight / bias / per-branch constants --------------------
    w_cols, b_cols, invt_cols = [], [], []
    for K, w, b in conv_params:
        K = int(K)
        wt = w.reshape(C, K * E).T                            # (K*E, C), (k,e)-major
        wt = jnp.pad(wt, ((0, (kmax - K) * E), (0, 0)))       # zero unused taps
        w_cols.append(wt)
        b_cols.append(jnp.asarray(b, jnp.float32).reshape(1, C))
        invt_cols.append(jnp.full((1, C), 1.0 / (W - K + 1), jnp.float32))
    w_fused = jnp.concatenate(w_cols, axis=1).astype(jnp.bfloat16)   # (kE, 3C)
    b_fused = jnp.concatenate(b_cols, axis=1)                        # (1, 3C)
    invt = jnp.concatenate(invt_cols, axis=1)                        # (1, 3C)

    # ---- per-branch {0,1} pooling selectors (validity mask folded in) -------
    r = jnp.arange(rows)
    t_in_row = r % W_row
    same_samp = (r[None, :] // W_row == jnp.arange(BB)[:, None])     # (BB, rows)
    sel = jnp.stack(
        [(same_samp & (t_in_row[None, :] < (W - int(K) + 1))).astype(jnp.bfloat16)
         for K, _, _ in conv_params], axis=0)                        # (nb, BB, rows)

    # ---- FC, padded to a lane-dense (128-wide) output -----------------------
    fcw = jnp.zeros((C3, OP), jnp.float32).at[:, :O].set(
        jnp.asarray(fc_w, jnp.float32).T).astype(jnp.bfloat16)
    fcb = jnp.full((1, OP), -1e30, jnp.float32).at[0, :O].set(
        jnp.asarray(fc_b, jnp.float32))

    # ---- cost estimate -------------------------------------------------------
    flops = G * (2 * rows * kE * C3            # conv
                 + nb * 2 * BB * rows * C      # pooling
                 + 2 * BB * C3 * OP)           # fc
    bytes_accessed = int(x_slab.size * 2 + w_fused.size * 2 + sel.size * 2
                         + fcw.size * 2
                         + (b_fused.size + invt.size + fcb.size) * 4
                         + Bp * OP * 4)
    cost = pl.CostEstimate(flops=int(flops), transcendentals=int(G * BB * OP),
                           bytes_accessed=bytes_accessed)

    const2 = lambda i: (0, 0)
    const3 = lambda i: (0, 0, 0)
    out = pl.pallas_call(
        _make_kernel(nb, C),
        out_shape=jax.ShapeDtypeStruct((Bp, OP), jnp.float32),
        grid_spec=pltpu.PrefetchScalarGridSpec(
            num_scalar_prefetch=0,
            grid=(G,),
            in_specs=[
                pl.BlockSpec((None, rows, kE), lambda i: (i, 0, 0)),  # x tile
                # grid-invariant, single-buffered residents:
                pl.BlockSpec((kE, C3), const2, pipeline_mode=pl.Buffered(1)),
                pl.BlockSpec((1, C3), const2, pipeline_mode=pl.Buffered(1)),
                pl.BlockSpec((nb, BB, rows), const3,
                             pipeline_mode=pl.Buffered(1)),
                pl.BlockSpec((1, C3), const2, pipeline_mode=pl.Buffered(1)),
                pl.BlockSpec((C3, OP), const2, pipeline_mode=pl.Buffered(1)),
                pl.BlockSpec((1, OP), const2, pipeline_mode=pl.Buffered(1)),
            ],
            out_specs=pl.BlockSpec((BB, OP), lambda i: (i, 0)),
        ),
        compiler_params=pltpu.CompilerParams(
            dimension_semantics=("parallel",),
            vmem_limit_bytes=vmem_limit),
        cost_estimate=cost,
    )(x_slab, w_fused, b_fused, sel, invt, fcw, fcb)
    return out[:B, :O]


def reference_forward(x, conv_params, fc_w, fc_b):
    """Pure-JAX f32 reference of the PyTorch forward (eval mode)."""
    B, W, E = x.shape
    pooled = []
    for K, w, b in conv_params:
        C = w.shape[0]
        T = W - K + 1
        win = jnp.stack([x[:, t:t + K, :].reshape(B, K * E) for t in range(T)],
                        axis=1)                                # (B, T, K*E)
        conv = win @ w.reshape(C, K * E).T + b                 # (B, T, C)
        pooled.append(jnp.mean(jax.nn.relu(conv), axis=1))     # avg_pool1d over T
    feat = jnp.concatenate(pooled, axis=1)
    return jax.nn.softmax(feat @ fc_w.T + fc_b, axis=-1)


def init_params(key, embedding_dim, output_size, kernel_dim, kernel_sizes):
    keys = jax.random.split(key, 2 * len(kernel_sizes) + 2)
    conv_params = []
    for i, K in enumerate(kernel_sizes):
        fan_in = K * embedding_dim
        w = (jax.random.normal(keys[2 * i], (kernel_dim, 1, K, embedding_dim),
                               jnp.float32) / jnp.sqrt(fan_in))
        b = jax.random.normal(keys[2 * i + 1], (kernel_dim,), jnp.float32) * 0.01
        conv_params.append((K, w, b))
    fan_in = len(kernel_sizes) * kernel_dim
    fc_w = (jax.random.normal(keys[-2], (output_size, fan_in), jnp.float32)
            / jnp.sqrt(fan_in))
    fc_b = jax.random.normal(keys[-1], (output_size,), jnp.float32) * 0.01
    return conv_params, fc_w, fc_b


if __name__ == "__main__":
    # Small shapes consistent with the module's forward contract.
    B, W, E = 2, 16, 32                  # batch, word_num, embedding_dim
    kernel_dim = 128                     # channels per conv branch
    kernel_sizes = (3, 4, 5)
    output_size = 8

    key = jax.random.PRNGKey(0)
    kx, kp = jax.random.split(key)
    x = jax.random.normal(kx, (B, W, E), jnp.float32)
    conv_params, fc_w, fc_b = init_params(kp, E, output_size, kernel_dim,
                                          kernel_sizes)

    out = cnn_classifier_forward(x, conv_params, fc_w, fc_b)
    out = jax.block_until_ready(out)
    ref = reference_forward(x, conv_params, fc_w, fc_b)

    assert out.shape == (B, output_size)
    assert bool(jnp.allclose(jnp.sum(out, axis=1), 1.0, atol=1e-2))
    assert bool(jnp.max(jnp.abs(out - ref)) < 5e-2)

    # Also exercise the multi-grid-step (G >= 2, both-TensorCore) path.
    B2 = 20
    x2 = jax.random.normal(jax.random.PRNGKey(1), (B2, W, E), jnp.float32)
    out2 = jax.block_until_ready(
        cnn_classifier_forward(x2, conv_params, fc_w, fc_b))
    ref2 = reference_forward(x2, conv_params, fc_w, fc_b)
    assert out2.shape == (B2, output_size)
    assert bool(jnp.max(jnp.abs(out2 - ref2)) < 5e-2)

    print("KERNEL_OK")
</pallas_src>

<mosaic_0001>
module attributes {stable_mosaic.version = 11 : i64} {
  func.func @kernel(%arg0: i32, %arg1: memref<1x32x160xbf16, #tpu.memory_space<vmem>>, %arg2: memref<160x384xbf16, #tpu.memory_space<vmem>>, %arg3: memref<1x384xf32, #tpu.memory_space<vmem>>, %arg4: memref<3x2x32xbf16, #tpu.memory_space<vmem>>, %arg5: memref<1x384xf32, #tpu.memory_space<vmem>>, %arg6: memref<384x128xbf16, #tpu.memory_space<vmem>>, %arg7: memref<1x128xf32, #tpu.memory_space<vmem>>, %arg8: memref<2x128xf32, #tpu.memory_space<vmem>>) attributes {dimension_semantics = [#tpu.dimension_semantics<parallel>], iteration_bounds = array<i64: 1>, scalar_prefetch = 0 : i64, scratch_operands = 0 : i64, tpu.core_type = #tpu.core_type<tc>, window_params = [{transform_indices = @transform_0, window_bounds = array<i64: 1, 32, 160>}, {pipeline_mode = #tpu.pipeline_mode<synchronous>, transform_indices = @transform_1, window_bounds = array<i64: 160, 384>}, {pipeline_mode = #tpu.pipeline_mode<synchronous>, transform_indices = @transform_2, window_bounds = array<i64: 1, 384>}, {pipeline_mode = #tpu.pipeline_mode<synchronous>, transform_indices = @transform_3, window_bounds = array<i64: 3, 2, 32>}, {pipeline_mode = #tpu.pipeline_mode<synchronous>, transform_indices = @transform_4, window_bounds = array<i64: 1, 384>}, {pipeline_mode = #tpu.pipeline_mode<synchronous>, transform_indices = @transform_5, window_bounds = array<i64: 384, 128>}, {pipeline_mode = #tpu.pipeline_mode<synchronous>, transform_indices = @transform_6, window_bounds = array<i64: 1, 128>}, {transform_indices = @transform_7, window_bounds = array<i64: 2, 128>}]} {
    %c0 = arith.constant 0 : index
    %c0_0 = arith.constant 0 : index
    %c0_1 = arith.constant 0 : index
    %0 = vector.load %arg1[%c0, %c0_0, %c0_1] : memref<1x32x160xbf16, #tpu.memory_space<vmem>>, vector<1x32x160xbf16>
    %1 = vector.shape_cast %0 : vector<1x32x160xbf16> to vector<32x160xbf16>
    %c0_2 = arith.constant 0 : index
    %c0_3 = arith.constant 0 : index
    %2 = vector.load %arg2[%c0_2, %c0_3] : memref<160x384xbf16, #tpu.memory_space<vmem>>, vector<160x384xbf16>
    %cst = arith.constant dense<0.000000e+00> : vector<32x384xf32>
    %3 = tpu.matmul %1, %2, %cst {dimension_numbers = #tpu.dot_dimension_numbers<[1], [0], [0], [1], [0, 0, 1, 1], [], []>} : vector<32x160xbf16>, vector<160x384xbf16>, vector<32x384xf32> -> vector<32x384xf32>
    %c0_4 = arith.constant 0 : index
    %c0_5 = arith.constant 0 : index
    %4 = vector.load %arg3[%c0_4, %c0_5] : memref<1x384xf32, #tpu.memory_space<vmem>>, vector<1x384xf32>
    %5 = vector.broadcast %4 : vector<1x384xf32> to vector<32x384xf32>
    %6 = arith.addf %3, %5 : vector<32x384xf32>
    %cst_6 = arith.constant 0.000000e+00 : f32
    %7 = vector.broadcast %cst_6 : f32 to vector<32x384xf32>
    %8 = arith.maximumf %6, %7 : vector<32x384xf32>
    %9 = arith.truncf %8 : vector<32x384xf32> to vector<32x384xbf16>
    %c0_7 = arith.constant 0 : index
    %c0_8 = arith.constant 0 : index
    %c0_9 = arith.constant 0 : index
    %10 = vector.load %arg4[%c0_7, %c0_8, %c0_9] : memref<3x2x32xbf16, #tpu.memory_space<vmem>>, vector<1x2x32xbf16>
    %11 = vector.shape_cast %10 : vector<1x2x32xbf16> to vector<2x32xbf16>
    %12 = vector.extract_strided_slice %9 {offsets = [0, 0], sizes = [32, 128], strides = [1, 1]} : vector<32x384xbf16> to vector<32x128xbf16>
    %cst_10 = arith.constant dense<0.000000e+00> : vector<2x128xf32>
    %13 = tpu.matmul %11, %12, %cst_10 {dimension_numbers = #tpu.dot_dimension_numbers<[1], [0], [0], [1], [0, 0, 1, 1], [], []>} : vector<2x32xbf16>, vector<32x128xbf16>, vector<2x128xf32> -> vector<2x128xf32>
    %c1 = arith.constant 1 : index
    %c0_11 = arith.constant 0 : index
    %c0_12 = arith.constant 0 : index
    %14 = vector.load %arg4[%c1, %c0_11, %c0_12] : memref<3x2x32xbf16, #tpu.memory_space<vmem>>, vector<1x2x32xbf16>
    %15 = vector.shape_cast %14 : vector<1x2x32xbf16> to vector<2x32xbf16>
    %16 = vector.extract_strided_slice %9 {offsets = [0, 128], sizes = [32, 128], strides = [1, 1]} : vector<32x384xbf16> to vector<32x128xbf16>
    %cst_13 = arith.constant dense<0.000000e+00> : vector<2x128xf32>
    %17 = tpu.matmul %15, %16, %cst_13 {dimension_numbers = #tpu.dot_dimension_numbers<[1], [0], [0], [1], [0, 0, 1, 1], [], []>} : vector<2x32xbf16>, vector<32x128xbf16>, vector<2x128xf32> -> vector<2x128xf32>
    %c2 = arith.constant 2 : index
    %c0_14 = arith.constant 0 : index
    %c0_15 = arith.constant 0 : index
    %18 = vector.load %arg4[%c2, %c0_14, %c0_15] : memref<3x2x32xbf16, #tpu.memory_space<vmem>>, vector<1x2x32xbf16>
    %19 = vector.shape_cast %18 : vector<1x2x32xbf16> to vector<2x32xbf16>
    %20 = vector.extract_strided_slice %9 {offsets = [0, 256], sizes = [32, 128], strides = [1, 1]} : vector<32x384xbf16> to vector<32x128xbf16>
    %cst_16 = arith.constant dense<0.000000e+00> : vector<2x128xf32>
    %21 = tpu.matmul %19, %20, %cst_16 {dimension_numbers = #tpu.dot_dimension_numbers<[1], [0], [0], [1], [0, 0, 1, 1], [], []>} : vector<2x32xbf16>, vector<32x128xbf16>, vector<2x128xf32> -> vector<2x128xf32>
    %22 = tpu.concatenate %13, %17, %21 in 1 : vector<2x128xf32>, vector<2x128xf32>, vector<2x128xf32> -> vector<2x384xf32>
    %c0_17 = arith.constant 0 : index
    %c0_18 = arith.constant 0 : index
    %23 = vector.load %arg5[%c0_17, %c0_18] : memref<1x384xf32, #tpu.memory_space<vmem>>, vector<1x384xf32>
    %24 = vector.broadcast %23 : vector<1x384xf32> to vector<2x384xf32>
    %25 = arith.mulf %22, %24 : vector<2x384xf32>
    %26 = arith.truncf %25 : vector<2x384xf32> to vector<2x384xbf16>
    %c0_19 = arith.constant 0 : index
    %c0_20 = arith.constant 0 : index
    %27 = vector.load %arg6[%c0_19, %c0_20] : memref<384x128xbf16, #tpu.memory_space<vmem>>, vector<384x128xbf16>
    %cst_21 = arith.constant dense<0.000000e+00> : vector<2x128xf32>
    %28 = tpu.matmul %26, %27, %cst_21 {dimension_numbers = #tpu.dot_dimension_numbers<[1], [0], [0], [1], [0, 0, 1, 1], [], []>} : vector<2x384xbf16>, vector<384x128xbf16>, vector<2x128xf32> -> vector<2x128xf32>
    %c0_22 = arith.constant 0 : index
    %c0_23 = arith.constant 0 : index
    %29 = vector.load %arg7[%c0_22, %c0_23] : memref<1x128xf32, #tpu.memory_space<vmem>>, vector<1x128xf32>
    %30 = vector.broadcast %29 : vector<1x128xf32> to vector<2x128xf32>
    %31 = arith.addf %28, %30 : vector<2x128xf32>
    %cst_24 = arith.constant dense<0xFF800000> : vector<2xf32>
    %32 = vector.multi_reduction <maximumf>, %31, %cst_24 [1] : vector<2x128xf32> to vector<2xf32>
    %33 = vector.shape_cast %32 : vector<2xf32> to vector<2x1xf32>
    %34 = vector.broadcast %33 : vector<2x1xf32> to vector<2x128xf32>
    %35 = arith.subf %31, %34 : vector<2x128xf32>
    %36 = math.exp %35 : vector<2x128xf32>
    %cst_25 = arith.constant dense<0.000000e+00> : vector<2xf32>
    %37 = vector.multi_reduction <add>, %36, %cst_25 [1] : vector<2x128xf32> to vector<2xf32>
    %38 = vector.shape_cast %37 : vector<2xf32> to vector<2x1xf32>
    %39 = tpu.reciprocal %38 : vector<2x1xf32> -> vector<2x1xf32>
    %40 = vector.broadcast %39 : vector<2x1xf32> to vector<2x128xf32>
    %41 = arith.mulf %36, %40 : vector<2x128xf32>
    %c0_26 = arith.constant 0 : index
    %c0_27 = arith.constant 0 : index
    %42 = vector.load %arg8[%c0_26, %c0_27] : memref<2x128xf32, #tpu.memory_space<vmem>>, vector<2x128xf32>
    tpu.vector_store %arg8[%c0_26, %c0_27], %41 {strides = array<i32>} : memref<2x128xf32, #tpu.memory_space<vmem>>, vector<2x128xf32>,
    return
  }
  func.func @transform_0(%arg0: i32) -> (i32, i32, i32) {
    %c0_i32 = arith.constant 0 : i32
    %c0_i32_0 = arith.constant 0 : i32
    %c0_i32_1 = arith.constant 0 : i32
    return %arg0, %c0_i32, %c0_i32_0 : i32, i32, i32
  }
  func.func @transform_1(%arg0: i32) -> (i32, i32) {
    %c0_i32 = arith.constant 0 : i32
    %c0_i32_0 = arith.constant 0 : i32
    %c0_i32_1 = arith.constant 0 : i32
    return %c0_i32, %c0_i32_0 : i32, i32
  }
  func.func @transform_2(%arg0: i32) -> (i32, i32) {
    %c0_i32 = arith.constant 0 : i32
    %c0_i32_0 = arith.constant 0 : i32
    %c0_i32_1 = arith.constant 0 : i32
    return %c0_i32, %c0_i32_0 : i32, i32
  }
  func.func @transform_3(%arg0: i32) -> (i32, i32, i32) {
    %c0_i32 = arith.constant 0 : i32
    %c0_i32_0 = arith.constant 0 : i32
    %c0_i32_1 = arith.constant 0 : i32
    %c0_i32_2 = arith.constant 0 : i32
    return %c0_i32, %c0_i32_0, %c0_i32_1 : i32, i32, i32
  }
  func.func @transform_4(%arg0: i32) -> (i32, i32) {
    %c0_i32 = arith.constant 0 : i32
    %c0_i32_0 = arith.constant 0 : i32
    %c0_i32_1 = arith.constant 0 : i32
    return %c0_i32, %c0_i32_0 : i32, i32
  }
  func.func @transform_5(%arg0: i32) -> (i32, i32) {
    %c0_i32 = arith.constant 0 : i32
    %c0_i32_0 = arith.constant 0 : i32
    %c0_i32_1 = arith.constant 0 : i32
    return %c0_i32, %c0_i32_0 : i32, i32
  }
  func.func @transform_6(%arg0: i32) -> (i32, i32) {
    %c0_i32 = arith.constant 0 : i32
    %c0_i32_0 = arith.constant 0 : i32
    %c0_i32_1 = arith.constant 0 : i32
    return %c0_i32, %c0_i32_0 : i32, i32
  }
  func.func @transform_7(%arg0: i32) -> (i32, i32) {
    %c0_i32 = arith.constant 0 : i32
    %c0_i32_0 = arith.constant 0 : i32
    return %arg0, %c0_i32 : i32, i32
  }
}

</mosaic_0001>

<llo_original>
// kernel: tpu_custom_call.1
$region0: #{tpu_custom_call.1}
  #allocation0 [shape = 'u32[]', space=smem, size = 0x4, offset = 0x4, fixed_abs, tag = 'smem constant byte address 0x4 - core index']
  #allocation1 [shape = 'u32[144,128]{1,0:T(1,128)}', space=vmem, size = 0x12000, scoped, tag = 'internal scratch']
  %s0 = inlined_call_operand.hbm [shape: bf16[1,32,160], index: 0, kind: input, shape index: {}]
  %s1 = inlined_call_operand.hbm [shape: bf16[160,384], index: 1, kind: input, shape index: {}]
  %s2 = inlined_call_operand.vmem [shape: f32[1,384], index: 2, kind: input, shape index: {}]
  %s3 = inlined_call_operand.hbm [shape: bf16[3,2,32], index: 3, kind: input, shape index: {}]
  %s4 = inlined_call_operand.vmem [shape: f32[1,384], index: 4, kind: input, shape index: {}]
  %s5 = inlined_call_operand.hbm [shape: bf16[384,128], index: 5, kind: input, shape index: {}]
  %s6 = inlined_call_operand.vmem [shape: f32[1,128], index: 6, kind: input, shape index: {}]
  %s7 = inlined_call_operand.hbm [shape: f32[2,128], index: 7, kind: output, shape index: {}]
  %s8 = sld [smem:[#allocation0]]
  $region54: #{tpu_custom_call.1} parent=0
    _
  %s10 = ssub.s32 1, %s8
  %s11 = scalar_select 0, %s10, %s8
  $region1: #{tpu_custom_call.1} parent=0
    #allocation2 [shape = 'u8[16384]{0}', space=vmem, size = 0x4000, scoped, tag = 'input window, operand 0, single buffered']
    #allocation3 [shape = 's32[1]{0}', space=sflag, size = 0x4, scoped, tag = 'scoped memory for tpu_custom_call.1']
    #allocation4 [shape = 's32[1]{0}', space=sflag, size = 0x4, scoped, tag = 'scoped memory for tpu_custom_call.1']
    #allocation5 [shape = 'u8[122880]{0}', space=vmem, size = 0x1e000, scoped, tag = 'input window, operand 1, single buffered']
    #allocation6 [shape = 's32[1]{0}', space=sflag, size = 0x4, scoped, tag = 'scoped memory for tpu_custom_call.1']
    #allocation7 [shape = 'u8[1536]{0}', space=vmem, size = 0x800, scoped, tag = 'input window, operand 3, single buffered']
    #allocation8 [shape = 'u8[98304]{0}', space=vmem, size = 0x18000, scoped, tag = 'input window, operand 5, single buffered']
    #allocation9 [shape = 's32[1]{0}', space=sflag, size = 0x4, scoped, tag = 'scoped memory for tpu_custom_call.1']
    #allocation10 [shape = 'u8[1024]{0}', space=vmem, size = 0x400, scoped, tag = 'output window, operand 0, single buffered']
    %12 = vsyncpa [#allocation3], 0
    %13 = vsyncpa [#allocation6], 0
    %14 = vsyncpa [#allocation9], 0
    %15 = vsyncpa [#allocation4], 0
    // Predicated region
    $region2: #{tpu_custom_call.1} parent=1 // pred_check
      _
    $region3: #{tpu_custom_call.1} parent=1 // pred_check_branch
      %17 = sbr.rel (0) target = $region5
    $region4: #{tpu_custom_call.1} parent=1 // pred_region
      %s19 = ssub.s32 512, 512
      %20 = vsyncadd [#allocation3], %s19
      %s21 = sshll.u32 [#allocation2], 4
      %s22 = int_to_ptr.vmem [resolvable:$true] %s21
      %27 = dma.hbm_to_vmem [thread:$0]  %s0, 512, %s22, [#allocation3], 128, 128, 8
    $region5: #{tpu_custom_call.1} parent=1 // pred_fallthru
      _
    // Predicated region
    $region6: #{tpu_custom_call.1} parent=1 // pred_check
      _
    $region7: #{tpu_custom_call.1} parent=1 // pred_check_branch
      %29 = sbr.rel (0) target = $region9
    $region8: #{tpu_custom_call.1} parent=1 // pred_region
      %s31 = ssub.s32 3840, 3840
      %32 = vsyncadd [#allocation6], %s31
      %s33 = sshll.u32 [#allocation5], 4
      %s34 = int_to_ptr.vmem [resolvable:$true] %s33
      %39 = dma.hbm_to_vmem [thread:$0]  %s1, 3840, %s34, [#allocation6], 192, 192, 12
    $region9: #{tpu_custom_call.1} parent=1 // pred_fallthru
      _
    // Predicated region
    $region10: #{tpu_custom_call.1} parent=1 // pred_check
      _
    $region11: #{tpu_custom_call.1} parent=1 // pred_check_branch
      %41 = sbr.rel (0) target = $region13
    $region12: #{tpu_custom_call.1} parent=1 // pred_region
      _
    $region13: #{tpu_custom_call.1} parent=1 // pred_fallthru
      _
    // Predicated region
    $region14: #{tpu_custom_call.1} parent=1 // pred_check
      _
    $region15: #{tpu_custom_call.1} parent=1 // pred_check_branch
      %43 = sbr.rel (0) target = $region17
    $region16: #{tpu_custom_call.1} parent=1 // pred_region
      %s45 = ssub.s32 48, 48
      %46 = vsyncadd [#allocation6], %s45
      %s47 = sshll.u32 [#allocation7], 4
      %s48 = int_to_ptr.vmem [resolvable:$true] %s47
      %53 = dma.hbm_to_vmem [thread:$0]  %s3, 48, %s48, [#allocation6], 16, 16, 1
    $region17: #{tpu_custom_call.1} parent=1 // pred_fallthru
      _
    // Predicated region
    $region18: #{tpu_custom_call.1} parent=1 // pred_check
      _
    $region19: #{tpu_custom_call.1} parent=1 // pred_check_branch
      %55 = sbr.rel (0) target = $region21
    $region20: #{tpu_custom_call.1} parent=1 // pred_region
      _
    $region21: #{tpu_custom_call.1} parent=1 // pred_fallthru
      _
    // Predicated region
    $region22: #{tpu_custom_call.1} parent=1 // pred_check
      _
    $region23: #{tpu_custom_call.1} parent=1 // pred_check_branch
      %57 = sbr.rel (0) target = $region25
    $region24: #{tpu_custom_call.1} parent=1 // pred_region
      %s59 = ssub.s32 3072, 3072
      %60 = vsyncadd [#allocation9], %s59
      %s61 = sshll.u32 [#allocation8], 4
      %s62 = int_to_ptr.vmem [resolvable:$true] %s61
      %67 = dma.hbm_to_vmem [thread:$0]  %s5, 3072, %s62, [#allocation9], 64, 64, 4
    $region25: #{tpu_custom_call.1} parent=1 // pred_fallthru
      _
    // Predicated region
    $region26: #{tpu_custom_call.1} parent=1 // pred_check
      _
    $region27: #{tpu_custom_call.1} parent=1 // pred_check_branch
      %69 = sbr.rel (0) target = $region29
    $region28: #{tpu_custom_call.1} parent=1 // pred_region
      _
    $region29: #{tpu_custom_call.1} parent=1 // pred_fallthru
      _
    // Predicated region
    $region30: #{tpu_custom_call.1} parent=1 // pred_check
      _
    $region31: #{tpu_custom_call.1} parent=1 // pred_check_branch
      %71 = sbr.rel (0) target = $region33
    $region32: #{tpu_custom_call.1} parent=1 // pred_region
      %72 = dma.done [#allocation3], 512
    $region33: #{tpu_custom_call.1} parent=1 // pred_fallthru
      _
    // Predicated region
    $region34: #{tpu_custom_call.1} parent=1 // pred_check
      _
    $region35: #{tpu_custom_call.1} parent=1 // pred_check_branch
      %74 = sbr.rel (0) target = $region37
    $region36: #{tpu_custom_call.1} parent=1 // pred_region
      %75 = dma.done [#allocation6], 3840
    $region37: #{tpu_custom_call.1} parent=1 // pred_fallthru
      _
    // Predicated region
    $region38: #{tpu_custom_call.1} parent=1 // pred_check
      _
    $region39: #{tpu_custom_call.1} parent=1 // pred_check_branch
      %77 = sbr.rel (0) target = $region41
    $region40: #{tpu_custom_call.1} parent=1 // pred_region
      %78 = dma.done [#allocation6], 48
    $region41: #{tpu_custom_call.1} parent=1 // pred_fallthru
      _
    // Predicated region
    $region42: #{tpu_custom_call.1} parent=1 // pred_check
      _
    $region43: #{tpu_custom_call.1} parent=1 // pred_check_branch
      %80 = sbr.rel (0) target = $region45
    $region44: #{tpu_custom_call.1} parent=1 // pred_region
      %81 = dma.done [#allocation9], 3072
    $region45: #{tpu_custom_call.1} parent=1 // pred_fallthru
      _
    %v83 = vld [vmem:[#allocation2] sm:$0xff]
    %v84 = vld [vmem:[#allocation2 + $0x8] sm:$0xff]
    %v85 = vld [vmem:[#allocation2 + $0x10] sm:$0xff]
    %v86 = vld [vmem:[#allocation2 + $0x18] sm:$0xff]
    %v87 = vld [vmem:[#allocation5] sm:$0xff]
    %v88 = vld [vmem:[#allocation5 + $0x8] sm:$0xf]
    %v89 = vld [vmem:[#allocation5 + $0xc] sm:$0xff]
    %v90 = vld [vmem:[#allocation5 + $0x14] sm:$0xf]
    %v91 = vld [vmem:[#allocation5 + $0x18] sm:$0xff]
    %v92 = vld [vmem:[#allocation5 + $0x20] sm:$0xf]
    %v93 = vld [vmem:[#allocation5 + $0x24] sm:$0xff]
    %v94 = vld [vmem:[#allocation5 + $0x2c] sm:$0xf]
    %v95 = vld [vmem:[#allocation5 + $0x30] sm:$0xff]
    %v96 = vld [vmem:[#allocation5 + $0x38] sm:$0xf]
    %v97 = vld [vmem:[#allocation5 + $0x3c] sm:$0xff]
    %v98 = vld [vmem:[#allocation5 + $0x44] sm:$0xf]
    %v99 = vld [vmem:[#allocation5 + $0x48] sm:$0xff]
    %v100 = vld [vmem:[#allocation5 + $0x50] sm:$0xf]
    %v101 = vld [vmem:[#allocation5 + $0x54] sm:$0xff]
    %v102 = vld [vmem:[#allocation5 + $0x5c] sm:$0xf]
    %v103 = vld [vmem:[#allocation5 + $0x60] sm:$0xff]
    %v104 = vld [vmem:[#allocation5 + $0x68] sm:$0xf]
    %v105 = vld [vmem:[#allocation5 + $0x6c] sm:$0xff]
    %v106 = vld [vmem:[#allocation5 + $0x74] sm:$0xf]
    %v107 = vld [vmem:[#allocation5 + $0x78] sm:$0xff]
    %v108 = vld [vmem:[#allocation5 + $0x80] sm:$0xf]
    %v109 = vld [vmem:[#allocation5 + $0x84] sm:$0xff]
    %v110 = vld [vmem:[#allocation5 + $0x8c] sm:$0xf]
    %v111 = vld [vmem:[#allocation5 + $0x90] sm:$0xff]
    %v112 = vld [vmem:[#allocation5 + $0x98] sm:$0xf]
    %v113 = vld [vmem:[#allocation5 + $0x9c] sm:$0xff]
    %v114 = vld [vmem:[#allocation5 + $0xa4] sm:$0xf]
    %v115 = vld [vmem:[#allocation5 + $0xa8] sm:$0xff]
    %v116 = vld [vmem:[#allocation5 + $0xb0] sm:$0xf]
    %v117 = vld [vmem:[#allocation5 + $0xb4] sm:$0xff]
    %v118 = vld [vmem:[#allocation5 + $0xbc] sm:$0xf]
    %v119 = vld [vmem:[#allocation5 + $0xc0] sm:$0xff]
    %v120 = vld [vmem:[#allocation5 + $0xc8] sm:$0xf]
    %v121 = vld [vmem:[#allocation5 + $0xcc] sm:$0xff]
    %v122 = vld [vmem:[#allocation5 + $0xd4] sm:$0xf]
    %v123 = vld [vmem:[#allocation5 + $0xd8] sm:$0xff]
    %v124 = vld [vmem:[#allocation5 + $0xe0] sm:$0xf]
    %v125 = vld [vmem:[#allocation5 + $0xe4] sm:$0xff]
    %v126 = vld [vmem:[#allocation5 + $0xec] sm:$0xf]
    %v127 = vld [vmem:[%s2] sm:$0x7]
    %v129 = vlaneseq
    %v130 = vshrl.u32 %v129, 7
    %v131 = vsub.s32 0, %v130
    %v132 = vrot.slane %v127, %v131
    %v133 = vlaneseq
    %v134 = vshrl.u32 %v133, 7
    %v135 = vsub.s32 1, %v134
    %v136 = vrot.slane %v127, %v135
    %v137 = vlaneseq
    %v138 = vshrl.u32 %v137, 7
    %v139 = vsub.s32 2, %v138
    %v140 = vrot.slane %v127, %v139
    %v148 = vunpack.c.l.b16 %v83
    %v149 = vunpack.c.h.b16 %v83
    %v150 = vunpack.c.l.b16 %v84
    %v151 = vunpack.c.h.b16 %v84
    %v152 = vunpack.c.l.b16 %v85
    %v153 = vunpack.c.h.b16 %v85
    %v154 = vunpack.c.l.b16 %v86
    %v155 = vunpack.c.h.b16 %v86
    %v156 = vpack.c.b16 %v150, %v148
    %v157 = vpack.c.b16 %v151, %v149
    %v158 = vpack.c.b16 %v154, %v152
    %v159 = vpack.c.b16 %v155, %v153
    %v202 = vunpack.c.l.b16 %v87
    %v203 = vunpack.c.h.b16 %v87
    %v204 = vunpack.c.l.b16 %v88
    %v205 = vunpack.c.l.b16 %v89
    %v206 = vunpack.c.h.b16 %v89
    %v207 = vunpack.c.l.b16 %v90
    %v208 = vunpack.c.l.b16 %v91
    %v209 = vunpack.c.h.b16 %v91
    %v210 = vunpack.c.l.b16 %v92
    %v211 = vunpack.c.l.b16 %v93
    %v212 = vunpack.c.h.b16 %v93
    %v213 = vunpack.c.l.b16 %v94
    %v214 = vunpack.c.l.b16 %v95
    %v215 = vunpack.c.h.b16 %v95
    %v216 = vunpack.c.l.b16 %v96
    %v217 = vunpack.c.l.b16 %v97
    %v218 = vunpack.c.h.b16 %v97
    %v219 = vunpack.c.l.b16 %v98
    %v220 = vunpack.c.l.b16 %v99
    %v221 = vunpack.c.h.b16 %v99
    %v222 = vunpack.c.l.b16 %v100
    %v223 = vunpack.c.l.b16 %v101
    %v224 = vunpack.c.h.b16 %v101
    %v225 = vunpack.c.l.b16 %v102
    %v226 = vunpack.c.l.b16 %v103
    %v227 = vunpack.c.h.b16 %v103
    %v228 = vunpack.c.l.b16 %v104
    %v229 = vunpack.c.l.b16 %v105
    %v230 = vunpack.c.h.b16 %v105
    %v231 = vunpack.c.l.b16 %v106
    %v232 = vunpack.c.l.b16 %v107
    %v233 = vunpack.c.h.b16 %v107
    %v234 = vunpack.c.l.b16 %v108
    %v235 = vunpack.c.l.b16 %v109
    %v236 = vunpack.c.h.b16 %v109
    %v237 = vunpack.c.l.b16 %v110
    %v238 = vunpack.c.l.b16 %v111
    %v239 = vunpack.c.h.b16 %v111
    %v240 = vunpack.c.l.b16 %v112
    %v241 = vunpack.c.l.b16 %v113
    %v242 = vunpack.c.h.b16 %v113
    %v243 = vunpack.c.l.b16 %v114
    %v244 = vunpack.c.l.b16 %v115
    %v245 = vunpack.c.h.b16 %v115
    %v246 = vunpack.c.l.b16 %v116
    %v247 = vunpack.c.l.b16 %v117
    %v248 = vunpack.c.h.b16 %v117
    %v249 = vunpack.c.l.b16 %v118
    %v250 = vunpack.c.l.b16 %v119
    %v251 = vunpack.c.h.b16 %v119
    %v252 = vunpack.c.l.b16 %v120
    %v253 = vunpack.c.l.b16 %v121
    %v254 = vunpack.c.h.b16 %v121
    %v255 = vunpack.c.l.b16 %v122
    %v256 = vunpack.c.l.b16 %v123
    %v257 = vunpack.c.h.b16 %v123
    %v258 = vunpack.c.l.b16 %v124
    %v259 = vunpack.c.l.b16 %v125
    %v260 = vunpack.c.h.b16 %v125
    %v261 = vunpack.c.l.b16 %v126
    %v262 = vpack.c.b16 %v205, %v202
    %v263 = vpack.c.b16 %v206, %v203
    %v264 = vpack.c.b16 %v207, %v204
    %v265 = vpack.c.b16 %v211, %v208
    %v266 = vpack.c.b16 %v212, %v209
    %v267 = vpack.c.b16 %v213, %v210
    %v268 = vpack.c.b16 %v217, %v214
    %v269 = vpack.c.b16 %v218, %v215
    %v270 = vpack.c.b16 %v219, %v216
    %v271 = vpack.c.b16 %v223, %v220
    %v272 = vpack.c.b16 %v224, %v221
    %v273 = vpack.c.b16 %v225, %v222
    %v274 = vpack.c.b16 %v229, %v226
    %v275 = vpack.c.b16 %v230, %v227
    %v276 = vpack.c.b16 %v231, %v228
    %v277 = vpack.c.b16 %v235, %v232
    %v278 = vpack.c.b16 %v236, %v233
    %v279 = vpack.c.b16 %v237, %v234
    %v280 = vpack.c.b16 %v241, %v238
    %v281 = vpack.c.b16 %v242, %v239
    %v282 = vpack.c.b16 %v243, %v240
    %v283 = vpack.c.b16 %v247, %v244
    %v284 = vpack.c.b16 %v248, %v245
    %v285 = vpack.c.b16 %v249, %v246
    %v286 = vpack.c.b16 %v253, %v250
    %v287 = vpack.c.b16 %v254, %v251
    %v288 = vpack.c.b16 %v255, %v252
    %v289 = vpack.c.b16 %v259, %v256
    %v290 = vpack.c.b16 %v260, %v257
    %v291 = vpack.c.b16 %v261, %v258
    %vm322 = vcmask 261120
    %v324 = vsel %vm322, %v157, 0
    %v327 = vsel %vm322, %v159, 0
    %329 = vmatprep.subr.bf16.mxu0 %v284
    %330 = vmatpush1.bf16.msra.mxu0 %v283
    %331 = vmatprep.subr.bf16.mxu0 %v281
    %332 = vmatpush1.bf16.msra.mxu0 %v280
    %333 = vmatprep.subr.bf16.mxu0 %v278
    %334 = vmatpush1.bf16.msra.mxu0 %v277
    %335 = vmatprep.subr.bf16.mxu0 %v275
    %336 = vmatpush1.bf16.msra.mxu0 %v274
    %337 = vmatprep.subr.bf16.mxu0 %v272
    %338 = vmatpush1.bf16.msra.mxu0 %v271
    %339 = vmatprep.subr.bf16.mxu0 %v269
    %340 = vmatpush1.bf16.msra.mxu0 %v268
    %341 = vmatprep.subr.bf16.mxu0 %v266
    %342 = vmatpush1.bf16.msra.mxu0 %v265
    %343 = vmatprep.subr.bf16.mxu0 %v263
    %344 = vmatpush1.bf16.msra.mxu0 %v262
    %345 = vmatprep.subr.bf16.mxu0 0
    %346 = vmatpush2.bf16.msra.mxu0 0
    %347 = vmatprep.subr.bf16.mxu0 0
    %348 = vmatpush2.bf16.msra.mxu0 0
    %349 = vmatprep.subr.bf16.mxu0 0
    %350 = vmatpush2.bf16.msra.mxu0 0
    %351 = vmatprep.subr.bf16.mxu0 0
    %352 = vmatpush2.bf16.msra.mxu0 0
    %353 = vmatprep.subr.bf16.mxu0 0
    %354 = vmatpush2.bf16.msra.mxu0 0
    %355 = vmatprep.subr.bf16.mxu0 0
    %356 = vmatpush2.bf16.msra.mxu0 0
    %357 = vmatprep.subr.bf16.mxu0 %v290
    %358 = vmatpush2.bf16.msra.mxu0 %v289
    %359 = vmatprep.subr.bf16.mxu0 %v287
    %360 = vmatpush2.bf16.msra.mxu0 %v286
    %361 = vmatprep.mubr.bf16.mxu0 %v324
    %362 = vmatmul.mubr.bf16.gmra.mxu0 %v156
    %v363 = vpop.f32.mrf.mxu0
    %v364 = vadd.f32 %v132, %v363
    %v365 = vpop.f32.mrf.mxu0
    %v366 = vadd.f32 %v136, %v365
    %v367 = vpop.f32.mrf.mxu0
    %v368 = vadd.f32 %v132, %v367
    %v369 = vpop.f32.mrf.mxu0
    %v370 = vadd.f32 %v136, %v369
    %371 = vmatprep.mubr.bf16.mxu0 %v327
    %372 = vmatmul.mubr.bf16.gmra.mxu0 %v158
    %v373 = vpop.f32.mrf.mxu0
    %v374 = vadd.f32 %v132, %v373
    %v375 = vpop.f32.mrf.mxu0
    %v376 = vadd.f32 %v136, %v375
    %v377 = vpop.f32.mrf.mxu0
    %v378 = vadd.f32 %v132, %v377
    %v379 = vpop.f32.mrf.mxu0
    %v380 = vadd.f32 %v136, %v379
    %381 = vdwg.mxu0
    %382 = vmatprep.subr.bf16.mxu0 0
    %383 = vmatpush1.bf16.msra.mxu0 %v285
    %384 = vmatprep.subr.bf16.mxu0 0
    %385 = vmatpush1.bf16.msra.mxu0 %v282
    %386 = vmatprep.subr.bf16.mxu0 0
    %387 = vmatpush1.bf16.msra.mxu0 %v279
    %388 = vmatprep.subr.bf16.mxu0 0
    %389 = vmatpush1.bf16.msra.mxu0 %v276
    %390 = vmatprep.subr.bf16.mxu0 0
    %391 = vmatpush1.bf16.msra.mxu0 %v273
    %392 = vmatprep.subr.bf16.mxu0 0
    %393 = vmatpush1.bf16.msra.mxu0 %v270
    %394 = vmatprep.subr.bf16.mxu0 0
    %395 = vmatpush1.bf16.msra.mxu0 %v267
    %396 = vmatprep.subr.bf16.mxu0 0
    %397 = vmatpush1.bf16.msra.mxu0 %v264
    %398 = vmatprep.subr.bf16.mxu0 0
    %399 = vmatpush2.bf16.msra.mxu0 0
    %400 = vmatprep.subr.bf16.mxu0 0
    %401 = vmatpush2.bf16.msra.mxu0 0
    %402 = vmatprep.subr.bf16.mxu0 0
    %403 = vmatpush2.bf16.msra.mxu0 0
    %404 = vmatprep.subr.bf16.mxu0 0
    %405 = vmatpush2.bf16.msra.mxu0 0
    %406 = vmatprep.subr.bf16.mxu0 0
    %407 = vmatpush2.bf16.msra.mxu0 0
    %408 = vmatprep.subr.bf16.mxu0 0
    %409 = vmatpush2.bf16.msra.mxu0 0
    %410 = vmatprep.subr.bf16.mxu0 0
    %411 = vmatpush2.bf16.msra.mxu0 %v291
    %412 = vmatprep.subr.bf16.mxu0 0
    %413 = vmatpush2.bf16.msra.mxu0 %v288
    %414 = vmatprep.mubr.bf16.mxu0 %v324
    %415 = vmatmul.mubr.bf16.gmra.mxu0 %v156
    %v416 = vpop.f32.mrf.mxu0
    %v417 = vadd.f32 %v140, %v416
    %v418 = vpop.f32.mrf.mxu0
    %v419 = vpop.f32.mrf.mxu0
    %v420 = vadd.f32 %v140, %v419
    %v421 = vpop.f32.mrf.mxu0
    %422 = vmatprep.mubr.bf16.mxu0 %v327
    %423 = vmatmul.mubr.bf16.gmra.mxu0 %v158
    %v424 = vpop.f32.mrf.mxu0
    %v425 = vadd.f32 %v140, %v424
    %v426 = vpop.f32.mrf.mxu0
    %v427 = vpop.f32.mrf.mxu0
    %v428 = vadd.f32 %v140, %v427
    %v429 = vpop.f32.mrf.mxu0
    %430 = vdwg.mxu0
    %v431 = vmax.f32 %v364, 0.0
    %v432 = vmax.f32 %v366, 0.0
    %v433 = vmax.f32 %v417, 0.0
    %v434 = vmax.f32 %v368, 0.0
    %v435 = vmax.f32 %v370, 0.0
    %v436 = vmax.f32 %v420, 0.0
    %v437 = vmax.f32 %v374, 0.0
    %v438 = vmax.f32 %v376, 0.0
    %v439 = vmax.f32 %v425, 0.0
    %v440 = vmax.f32 %v378, 0.0
    %v441 = vmax.f32 %v380, 0.0
    %v442 = vmax.f32 %v428, 0.0
    %v443 = vpack.c.bf16 %v434, %v431
    %v444 = vpack.c.bf16 %v435, %v432
    %v445 = vpack.c.bf16 %v436, %v433
    %v446 = vpack.c.bf16 %v440, %v437
    %v447 = vpack.c.bf16 %v441, %v438
    %v448 = vpack.c.bf16 %v442, %v439
    %v449 = vld [vmem:[#allocation7] sm:$0x1]
    %v451 = vsel %vm322, %v449, 0
    %453 = vmatprep.subr.bf16.mxu0 0
    %454 = vmatpush1.bf16.msra.mxu0 0
    %455 = vmatprep.subr.bf16.mxu0 0
    %456 = vmatpush1.bf16.msra.mxu0 0
    %457 = vmatprep.subr.bf16.mxu0 0
    %458 = vmatpush1.bf16.msra.mxu0 0
    %459 = vmatprep.subr.bf16.mxu0 0
    %460 = vmatpush1.bf16.msra.mxu0 0
    %461 = vmatprep.subr.bf16.mxu0 0
    %462 = vmatpush1.bf16.msra.mxu0 0
    %463 = vmatprep.subr.bf16.mxu0 0
    %464 = vmatpush1.bf16.msra.mxu0 0
    %465 = vmatprep.subr.bf16.mxu0 0
    %466 = vmatpush1.bf16.msra.mxu0 %v446
    %467 = vmatprep.subr.bf16.mxu0 0
    %468 = vmatpush1.bf16.msra.mxu0 %v443
    %469 = vmatprep.subr.bf16.mxu0 0
    %470 = vmatpush2.bf16.msra.mxu0 0
    %471 = vmatprep.subr.bf16.mxu0 0
    %472 = vmatpush2.bf16.msra.mxu0 0
    %473 = vmatprep.subr.bf16.mxu0 0
    %474 = vmatpush2.bf16.msra.mxu0 0
    %475 = vmatprep.subr.bf16.mxu0 0
    %476 = vmatpush2.bf16.msra.mxu0 0
    %477 = vmatprep.subr.bf16.mxu0 0
    %478 = vmatpush2.bf16.msra.mxu0 0
    %479 = vmatprep.subr.bf16.mxu0 0
    %480 = vmatpush2.bf16.msra.mxu0 0
    %481 = vmatprep.subr.bf16.mxu0 0
    %482 = vmatpush2.bf16.msra.mxu0 0
    %483 = vmatprep.subr.bf16.mxu0 0
    %484 = vmatpush2.bf16.msra.mxu0 0
    %485 = vmatprep.mubr.bf16.mxu0 0
    %486 = vmatmul.mubr.bf16.gmra.mxu0 %v451
    %v487 = vpop.f32.mrf.mxu0
    %v488 = vadd.f32 0.0, %v487
    %v489 = vpop.f32.mrf.mxu0
    %v490 = vpop.f32.mrf.mxu0
    %v491 = vpop.f32.mrf.mxu0
    %492 = vdwg.mxu0
    %s493 = scalar_lea.vmem [#allocation7], 1
    %v494 = vld [vmem:[%s493] sm:$0x1]
    %v496 = vsel %vm322, %v494, 0
    %498 = vmatprep.subr.bf16.mxu0 0
    %499 = vmatpush1.bf16.msra.mxu0 0
    %500 = vmatprep.subr.bf16.mxu0 0
    %501 = vmatpush1.bf16.msra.mxu0 0
    %502 = vmatprep.subr.bf16.mxu0 0
    %503 = vmatpush1.bf16.msra.mxu0 0
    %504 = vmatprep.subr.bf16.mxu0 0
    %505 = vmatpush1.bf16.msra.mxu0 0
    %506 = vmatprep.subr.bf16.mxu0 0
    %507 = vmatpush1.bf16.msra.mxu0 0
    %508 = vmatprep.subr.bf16.mxu0 0
    %509 = vmatpush1.bf16.msra.mxu0 0
    %510 = vmatprep.subr.bf16.mxu0 0
    %511 = vmatpush1.bf16.msra.mxu0 %v447
    %512 = vmatprep.subr.bf16.mxu0 0
    %513 = vmatpush1.bf16.msra.mxu0 %v444
    %514 = vmatprep.subr.bf16.mxu0 0
    %515 = vmatpush2.bf16.msra.mxu0 0
    %516 = vmatprep.subr.bf16.mxu0 0
    %517 = vmatpush2.bf16.msra.mxu0 0
    %518 = vmatprep.subr.bf16.mxu0 0
    %519 = vmatpush2.bf16.msra.mxu0 0
    %520 = vmatprep.subr.bf16.mxu0 0
    %521 = vmatpush2.bf16.msra.mxu0 0
    %522 = vmatprep.subr.bf16.mxu0 0
    %523 = vmatpush2.bf16.msra.mxu0 0
    %524 = vmatprep.subr.bf16.mxu0 0
    %525 = vmatpush2.bf16.msra.mxu0 0
    %526 = vmatprep.subr.bf16.mxu0 0
    %527 = vmatpush2.bf16.msra.mxu0 0
    %528 = vmatprep.subr.bf16.mxu0 0
    %529 = vmatpush2.bf16.msra.mxu0 0
    %530 = vmatprep.mubr.bf16.mxu0 0
    %531 = vmatmul.mubr.bf16.gmra.mxu0 %v496
    %v532 = vpop.f32.mrf.mxu0
    %v533 = vadd.f32 0.0, %v532
    %v534 = vpop.f32.mrf.mxu0
    %v535 = vpop.f32.mrf.mxu0
    %v536 = vpop.f32.mrf.mxu0
    %537 = vdwg.mxu0
    %s538 = scalar_lea.vmem [#allocation7], 2
    %v539 = vld [vmem:[%s538] sm:$0x1]
    %v541 = vsel %vm322, %v539, 0
    %543 = vmatprep.subr.bf16.mxu0 0
    %544 = vmatpush1.bf16.msra.mxu0 0
    %545 = vmatprep.subr.bf16.mxu0 0
    %546 = vmatpush1.bf16.msra.mxu0 0
    %547 = vmatprep.subr.bf16.mxu0 0
    %548 = vmatpush1.bf16.msra.mxu0 0
    %549 = vmatprep.subr.bf16.mxu0 0
    %550 = vmatpush1.bf16.msra.mxu0 0
    %551 = vmatprep.subr.bf16.mxu0 0
    %552 = vmatpush1.bf16.msra.mxu0 0
    %553 = vmatprep.subr.bf16.mxu0 0
    %554 = vmatpush1.bf16.msra.mxu0 0
    %555 = vmatprep.subr.bf16.mxu0 0
    %556 = vmatpush1.bf16.msra.mxu0 %v448
    %557 = vmatprep.subr.bf16.mxu0 0
    %558 = vmatpush1.bf16.msra.mxu0 %v445
    %559 = vmatprep.subr.bf16.mxu0 0
    %560 = vmatpush2.bf16.msra.mxu0 0
    %561 = vmatprep.subr.bf16.mxu0 0
    %562 = vmatpush2.bf16.msra.mxu0 0
    %563 = vmatprep.subr.bf16.mxu0 0
    %564 = vmatpush2.bf16.msra.mxu0 0
    %565 = vmatprep.subr.bf16.mxu0 0
    %566 = vmatpush2.bf16.msra.mxu0 0
    %567 = vmatprep.subr.bf16.mxu0 0
    %568 = vmatpush2.bf16.msra.mxu0 0
    %569 = vmatprep.subr.bf16.mxu0 0
    %570 = vmatpush2.bf16.msra.mxu0 0
    %571 = vmatprep.subr.bf16.mxu0 0
    %572 = vmatpush2.bf16.msra.mxu0 0
    %573 = vmatprep.subr.bf16.mxu0 0
    %574 = vmatpush2.bf16.msra.mxu0 0
    %575 = vmatprep.mubr.bf16.mxu0 0
    %576 = vmatmul.mubr.bf16.gmra.mxu0 %v541
    %v577 = vpop.f32.mrf.mxu0
    %v578 = vadd.f32 0.0, %v577
    %v579 = vpop.f32.mrf.mxu0
    %v580 = vpop.f32.mrf.mxu0
    %v581 = vpop.f32.mrf.mxu0
    %582 = vdwg.mxu0
    %v583 = vld [vmem:[%s4] sm:$0x7]
    %v585 = vlaneseq
    %v586 = vshrl.u32 %v585, 7
    %v587 = vsub.s32 0, %v586
    %v588 = vrot.slane %v583, %v587
    %v589 = vlaneseq
    %v590 = vshrl.u32 %v589, 7
    %v591 = vsub.s32 1, %v590
    %v592 = vrot.slane %v583, %v591
    %v593 = vlaneseq
    %v594 = vshrl.u32 %v593, 7
    %v595 = vsub.s32 2, %v594
    %v596 = vrot.slane %v583, %v595
    %v600 = vmul.f32 %v488, %v588
    %v601 = vmul.f32 %v533, %v592
    %v602 = vmul.f32 %v578, %v596
    %v603 = vpack.c.bf16 %v600, %v600
    %v604 = vpack.c.bf16 %v601, %v601
    %v605 = vpack.c.bf16 %v602, %v602
    %v606 = vld [vmem:[#allocation8] sm:$0xf]
    %v607 = vld [vmem:[#allocation8 + $0x4] sm:$0xf]
    %v608 = vld [vmem:[#allocation8 + $0x8] sm:$0xf]
    %v609 = vld [vmem:[#allocation8 + $0xc] sm:$0xf]
    %v610 = vld [vmem:[#allocation8 + $0x10] sm:$0xf]
    %v611 = vld [vmem:[#allocation8 + $0x14] sm:$0xf]
    %v612 = vld [vmem:[#allocation8 + $0x18] sm:$0xf]
    %v613 = vld [vmem:[#allocation8 + $0x1c] sm:$0xf]
    %v614 = vld [vmem:[#allocation8 + $0x20] sm:$0xf]
    %v615 = vld [vmem:[#allocation8 + $0x24] sm:$0xf]
    %v616 = vld [vmem:[#allocation8 + $0x28] sm:$0xf]
    %v617 = vld [vmem:[#allocation8 + $0x2c] sm:$0xf]
    %v618 = vld [vmem:[#allocation8 + $0x30] sm:$0xf]
    %v619 = vld [vmem:[#allocation8 + $0x34] sm:$0xf]
    %v620 = vld [vmem:[#allocation8 + $0x38] sm:$0xf]
    %v621 = vld [vmem:[#allocation8 + $0x3c] sm:$0xf]
    %v622 = vld [vmem:[#allocation8 + $0x40] sm:$0xf]
    %v623 = vld [vmem:[#allocation8 + $0x44] sm:$0xf]
    %v624 = vld [vmem:[#allocation8 + $0x48] sm:$0xf]
    %v625 = vld [vmem:[#allocation8 + $0x4c] sm:$0xf]
    %v626 = vld [vmem:[#allocation8 + $0x50] sm:$0xf]
    %v627 = vld [vmem:[#allocation8 + $0x54] sm:$0xf]
    %v628 = vld [vmem:[#allocation8 + $0x58] sm:$0xf]
    %v629 = vld [vmem:[#allocation8 + $0x5c] sm:$0xf]
    %v630 = vld [vmem:[#allocation8 + $0x60] sm:$0xf]
    %v631 = vld [vmem:[#allocation8 + $0x64] sm:$0xf]
    %v632 = vld [vmem:[#allocation8 + $0x68] sm:$0xf]
    %v633 = vld [vmem:[#allocation8 + $0x6c] sm:$0xf]
    %v634 = vld [vmem:[#allocation8 + $0x70] sm:$0xf]
    %v635 = vld [vmem:[#allocation8 + $0x74] sm:$0xf]
    %v636 = vld [vmem:[#allocation8 + $0x78] sm:$0xf]
    %v637 = vld [vmem:[#allocation8 + $0x7c] sm:$0xf]
    %v638 = vld [vmem:[#allocation8 + $0x80] sm:$0xf]
    %v639 = vld [vmem:[#allocation8 + $0x84] sm:$0xf]
    %v640 = vld [vmem:[#allocation8 + $0x88] sm:$0xf]
    %v641 = vld [vmem:[#allocation8 + $0x8c] sm:$0xf]
    %v642 = vld [vmem:[#allocation8 + $0x90] sm:$0xf]
    %v643 = vld [vmem:[#allocation8 + $0x94] sm:$0xf]
    %v644 = vld [vmem:[#allocation8 + $0x98] sm:$0xf]
    %v645 = vld [vmem:[#allocation8 + $0x9c] sm:$0xf]
    %v646 = vld [vmem:[#allocation8 + $0xa0] sm:$0xf]
    %v647 = vld [vmem:[#allocation8 + $0xa4] sm:$0xf]
    %v648 = vld [vmem:[#allocation8 + $0xa8] sm:$0xf]
    %v649 = vld [vmem:[#allocation8 + $0xac] sm:$0xf]
    %v650 = vld [vmem:[#allocation8 + $0xb0] sm:$0xf]
    %v651 = vld [vmem:[#allocation8 + $0xb4] sm:$0xf]
    %v652 = vld [vmem:[#allocation8 + $0xb8] sm:$0xf]
    %v653 = vld [vmem:[#allocation8 + $0xbc] sm:$0xf]
    %v654 = vld [vmem:[%s6] sm:$0x1]
    %v656 = vlaneseq
    %v657 = vshrl.u32 %v656, 7
    %v658 = vsub.s32 0, %v657
    %v659 = vrot.slane %v654, %v658
    %v709 = vunpack.c.l.b16 %v606
    %v710 = vunpack.c.l.b16 %v607
    %v711 = vunpack.c.l.b16 %v608
    %v712 = vunpack.c.l.b16 %v609
    %v713 = vunpack.c.l.b16 %v610
    %v714 = vunpack.c.l.b16 %v611
    %v715 = vunpack.c.l.b16 %v612
    %v716 = vunpack.c.l.b16 %v613
    %v717 = vunpack.c.l.b16 %v614
    %v718 = vunpack.c.l.b16 %v615
    %v719 = vunpack.c.l.b16 %v616
    %v720 = vunpack.c.l.b16 %v617
    %v721 = vunpack.c.l.b16 %v618
    %v722 = vunpack.c.l.b16 %v619
    %v723 = vunpack.c.l.b16 %v620
    %v724 = vunpack.c.l.b16 %v621
    %v725 = vunpack.c.l.b16 %v622
    %v726 = vunpack.c.l.b16 %v623
    %v727 = vunpack.c.l.b16 %v624
    %v728 = vunpack.c.l.b16 %v625
    %v729 = vunpack.c.l.b16 %v626
    %v730 = vunpack.c.l.b16 %v627
    %v731 = vunpack.c.l.b16 %v628
    %v732 = vunpack.c.l.b16 %v629
    %v733 = vunpack.c.l.b16 %v630
    %v734 = vunpack.c.l.b16 %v631
    %v735 = vunpack.c.l.b16 %v632
    %v736 = vunpack.c.l.b16 %v633
    %v737 = vunpack.c.l.b16 %v634
    %v738 = vunpack.c.l.b16 %v635
    %v739 = vunpack.c.l.b16 %v636
    %v740 = vunpack.c.l.b16 %v637
    %v741 = vunpack.c.l.b16 %v638
    %v742 = vunpack.c.l.b16 %v639
    %v743 = vunpack.c.l.b16 %v640
    %v744 = vunpack.c.l.b16 %v641
    %v745 = vunpack.c.l.b16 %v642
    %v746 = vunpack.c.l.b16 %v643
    %v747 = vunpack.c.l.b16 %v644
    %v748 = vunpack.c.l.b16 %v645
    %v749 = vunpack.c.l.b16 %v646
    %v750 = vunpack.c.l.b16 %v647
    %v751 = vunpack.c.l.b16 %v648
    %v752 = vunpack.c.l.b16 %v649
    %v753 = vunpack.c.l.b16 %v650
    %v754 = vunpack.c.l.b16 %v651
    %v755 = vunpack.c.l.b16 %v652
    %v756 = vunpack.c.l.b16 %v653
    %v757 = vpack.c.b16 %v710, %v709
    %v758 = vpack.c.b16 %v712, %v711
    %v759 = vpack.c.b16 %v714, %v713
    %v760 = vpack.c.b16 %v716, %v715
    %v761 = vpack.c.b16 %v718, %v717
    %v762 = vpack.c.b16 %v720, %v719
    %v763 = vpack.c.b16 %v722, %v721
    %v764 = vpack.c.b16 %v724, %v723
    %v765 = vpack.c.b16 %v726, %v725
    %v766 = vpack.c.b16 %v728, %v727
    %v767 = vpack.c.b16 %v730, %v729
    %v768 = vpack.c.b16 %v732, %v731
    %v769 = vpack.c.b16 %v734, %v733
    %v770 = vpack.c.b16 %v736, %v735
    %v771 = vpack.c.b16 %v738, %v737
    %v772 = vpack.c.b16 %v740, %v739
    %v773 = vpack.c.b16 %v742, %v741
    %v774 = vpack.c.b16 %v744, %v743
    %v775 = vpack.c.b16 %v746, %v745
    %v776 = vpack.c.b16 %v748, %v747
    %v777 = vpack.c.b16 %v750, %v749
    %v778 = vpack.c.b16 %v752, %v751
    %v779 = vpack.c.b16 %v754, %v753
    %v780 = vpack.c.b16 %v756, %v755
    %805 = vmatprep.subr.bf16.mxu0 0
    %806 = vmatpush1.bf16.msra.mxu0 %v764
    %807 = vmatprep.subr.bf16.mxu0 0
    %808 = vmatpush1.bf16.msra.mxu0 %v763
    %809 = vmatprep.subr.bf16.mxu0 0
    %810 = vmatpush1.bf16.msra.mxu0 %v762
    %811 = vmatprep.subr.bf16.mxu0 0
    %812 = vmatpush1.bf16.msra.mxu0 %v761
    %813 = vmatprep.subr.bf16.mxu0 0
    %814 = vmatpush1.bf16.msra.mxu0 %v760
    %815 = vmatprep.subr.bf16.mxu0 0
    %816 = vmatpush1.bf16.msra.mxu0 %v759
    %817 = vmatprep.subr.bf16.mxu0 0
    %818 = vmatpush1.bf16.msra.mxu0 %v758
    %819 = vmatprep.subr.bf16.mxu0 0
    %820 = vmatpush1.bf16.msra.mxu0 %v757
    %821 = vmatprep.subr.bf16.mxu0 0
    %822 = vmatpush2.bf16.msra.mxu0 %v772
    %823 = vmatprep.subr.bf16.mxu0 0
    %824 = vmatpush2.bf16.msra.mxu0 %v771
    %825 = vmatprep.subr.bf16.mxu0 0
    %826 = vmatpush2.bf16.msra.mxu0 %v770
    %827 = vmatprep.subr.bf16.mxu0 0
    %828 = vmatpush2.bf16.msra.mxu0 %v769
    %829 = vmatprep.subr.bf16.mxu0 0
    %830 = vmatpush2.bf16.msra.mxu0 %v768
    %831 = vmatprep.subr.bf16.mxu0 0
    %832 = vmatpush2.bf16.msra.mxu0 %v767
    %833 = vmatprep.subr.bf16.mxu0 0
    %834 = vmatpush2.bf16.msra.mxu0 %v766
    %835 = vmatprep.subr.bf16.mxu0 0
    %836 = vmatpush2.bf16.msra.mxu0 %v765
    %837 = vmatprep.mubr.bf16.mxu0 %v604
    %838 = vmatmul.mubr.bf16.gmra.mxu0 %v603
    %v839 = vpop.f32.mrf.mxu0
    %v840 = vadd.f32 %v659, %v839
    %v841 = vpop.f32.mrf.mxu0
    %v842 = vpop.f32.mrf.mxu0
    %v843 = vpop.f32.mrf.mxu0
    %844 = vdwg.mxu0
    %845 = vmatprep.subr.bf16.mxu0 0
    %846 = vmatpush1.bf16.msra.mxu0 %v780
    %847 = vmatprep.subr.bf16.mxu0 0
    %848 = vmatpush1.bf16.msra.mxu0 %v779
    %849 = vmatprep.subr.bf16.mxu0 0
    %850 = vmatpush1.bf16.msra.mxu0 %v778
    %851 = vmatprep.subr.bf16.mxu0 0
    %852 = vmatpush1.bf16.msra.mxu0 %v777
    %853 = vmatprep.subr.bf16.mxu0 0
    %854 = vmatpush1.bf16.msra.mxu0 %v776
    %855 = vmatprep.subr.bf16.mxu0 0
    %856 = vmatpush1.bf16.msra.mxu0 %v775
    %857 = vmatprep.subr.bf16.mxu0 0
    %858 = vmatpush1.bf16.msra.mxu0 %v774
    %859 = vmatprep.subr.bf16.mxu0 0
    %860 = vmatpush1.bf16.msra.mxu0 %v773
    %861 = vmatprep.subr.bf16.mxu0 0
    %862 = vmatpush2.bf16.msra.mxu0 0
    %863 = vmatprep.subr.bf16.mxu0 0
    %864 = vmatpush2.bf16.msra.mxu0 0
    %865 = vmatprep.subr.bf16.mxu0 0
    %866 = vmatpush2.bf16.msra.mxu0 0
    %867 = vmatprep.subr.bf16.mxu0 0
    %868 = vmatpush2.bf16.msra.mxu0 0
    %869 = vmatprep.subr.bf16.mxu0 0
    %870 = vmatpush2.bf16.msra.mxu0 0
    %871 = vmatprep.subr.bf16.mxu0 0
    %872 = vmatpush2.bf16.msra.mxu0 0
    %873 = vmatprep.subr.bf16.mxu0 0
    %874 = vmatpush2.bf16.msra.mxu0 0
    %875 = vmatprep.subr.bf16.mxu0 0
    %876 = vmatpush2.bf16.msra.mxu0 0
    %877 = vmatprep.mubr.bf16.mxu0 0
    %878 = vmatmul.mubr.bf16.gmra.mxu0 %v605
    %v879 = vpop.f32.mrf.mxu0
    %v880 = vadd.f32 %v840, %v879
    %v881 = vpop.f32.mrf.mxu0
    %v882 = vpop.f32.mrf.mxu0
    %v883 = vpop.f32.mrf.mxu0
    %884 = vdwg.mxu0
    %vm885 = vcmask 1041408
    %v886 = vsel %vm885, %v880, -inf
    %887 = vmax.xlane.f32.xlu0 %v886
    %v888 = vpop.xlane.xlu0 %887
    %v889 = vsub.f32 %v880, %v888
    %v890 = vmul.f32 %v889, 1.442695
    %v891 = vpow.pop %v890
    %v892 = vsel %vm885, %v891, 0.0
    %893 = vadd.xlane.f32.xlu0 %v892
    %v894 = vpop.xlane.xlu0 %893
    %v895 = vrcp.pop %v894
    %v896 = vmul.f32 %v891, %v895
    %897 = vst [vmem:[#allocation10] sm:$0x3] %v896
    // Predicated region
    $region46: #{tpu_custom_call.1} parent=1 // pred_check
      _
    $region47: #{tpu_custom_call.1} parent=1 // pred_check_branch
      %899 = sbr.rel (0) target = $region49
    $region48: #{tpu_custom_call.1} parent=1 // pred_region
      %s901 = ssub.s32 32, 32
      %902 = vsyncadd [#allocation4], %s901
      %s904 = sshll.u32 [#allocation10], 4
      %s905 = int_to_ptr.vmem [resolvable:$true] %s904
      %907 = dma.vmem_to_hbm [thread:$0]  %s905, 32, %s7, [#allocation4]
    $region49: #{tpu_custom_call.1} parent=1 // pred_fallthru
      _
    // Predicated region
    $region50: #{tpu_custom_call.1} parent=1 // pred_check
      _
    $region51: #{tpu_custom_call.1} parent=1 // pred_check_branch
      %909 = sbr.rel (0) target = $region53
    $region52: #{tpu_custom_call.1} parent=1 // pred_region
      %910 = dma.done [#allocation4], 32
    $region53: #{tpu_custom_call.1} parent=1 // pred_fallthru
      _
    %911 = vsyncpa [#allocation3], 1
    %912 = vsyncpa [#allocation6], 1
    %913 = vsyncpa [#allocation9], 1
    %914 = vsyncpa [#allocation4], 1

</llo_original>
